<compile_context>
chip_gen: v5e
topology: v5e:2x2
jax: 0.10.0
libtpu: 0.0.40
codegen_flags: <defaults>
</compile_context>

<pallas_src>
import math

import jax
import jax.numpy as jnp
from jax.experimental import pallas as pl
from jax.experimental.pallas import tpu as pltpu


def _batch_drop_kernel(params_ref, hh_ref, ww_ref, x_ref, o_ref):
    # params_ref: SMEM int32[4] = [sx, sy, rh, rw]   (scalar prefetch)
    # hh_ref/ww_ref: [1, L] int32 spatial row / col coordinate of each lane
    # x_ref/o_ref:   [tile, L]
    sx = params_ref[0]
    sy = params_ref[1]
    rh = params_ref[2]
    rw = params_ref[3]

    hh = hh_ref[...]
    ww = ww_ref[...]
    drop = (hh >= sx) & (hh < sx + rh) & (ww >= sy) & (ww < sy + rw)  # [1, L]

    # jnp.where keeps the [1, L] predicate as a cheap sublane-broadcast select;
    # no materialized [tile, L] keep-mask temp (perf-review item).
    o_ref[...] = jnp.where(drop, 0, x_ref[...]).astype(o_ref.dtype)


def _round_up(a, b):
    return -(-a // b) * b


def _pick_tile_rows(rows, row_bytes, sub, cap_bytes):
    """Largest row-tile (multiple of `sub`) within `cap_bytes`, preferring an
    exact divisor of `rows` (no ragged tail) and leaving >= 2 grid steps when
    possible so v7x's two TensorCores both get work."""
    if rows <= sub:
        return rows
    max_rows = max(sub, (cap_bytes // max(row_bytes, 1)) // sub * sub)
    # Keep at least two grid steps on the parallel axis.
    half = _round_up(-(-rows // 2), sub)
    upper = max(sub, min(max_rows, half) // sub * sub)
    # Prefer a tile that divides `rows` exactly.
    t = upper
    while t >= sub:
        if rows % t == 0:
            return t
        t -= sub
    return upper


def batch_drop_apply(x, sx, sy, rh, rw):
    """Apply the batch-drop mask for a given rectangle (sx, sy, rh, rw)."""
    B, C, H, W = x.shape
    HW = H * W
    N = B * C * HW
    itemsize = jnp.dtype(x.dtype).itemsize
    sub = max(8, 32 // itemsize)  # f32 -> 8, bf16 -> 16, int8/fp8 -> 32

    # Lane-dense retiling: L is a multiple of both HW and 128 so every row of
    # the [rows, L] view starts on an (H,W)-map boundary (coordinate rows are
    # row-independent) and every vst is full-width. Fall back to [B*C, HW]
    # when no such L divides N.
    base = HW * 128 // math.gcd(HW, 128)  # lcm(HW, 128)
    if N % base == 0 and base <= 4096:
        L = base
    else:
        L = HW  # masked tail stores only if HW % 128 != 0 (rare fallback)
    rows = N // L
    x2 = x.reshape(rows, L)

    # ~6 MiB per (tile, L) buffer: near the HBM roofline on v5e/v6e/v7x while
    # the double-buffered in+out pipeline (4 x tile) stays well inside v7x's
    # 64 MiB physical VMEM.
    tile = _pick_tile_rows(rows, L * itemsize, sub, 6 * 1024 * 1024)
    grid = (pl.cdiv(rows, tile),)
    tile_bytes = tile * L * itemsize
    vmem_limit = int(min(48 * 1024 * 1024, max(16 * 1024 * 1024, 6 * tile_bytes)))

    params = jnp.array([sx, sy, rh, rw], dtype=jnp.int32)
    lane = jnp.arange(L, dtype=jnp.int32)
    hw = lane % HW
    hh = (hw // W).reshape(1, L)
    ww = (hw % W).reshape(1, L)

    out = pl.pallas_call(
        _batch_drop_kernel,
        out_shape=jax.ShapeDtypeStruct((rows, L), x.dtype),
        grid_spec=pltpu.PrefetchScalarGridSpec(
            num_scalar_prefetch=1,
            grid=grid,
            in_specs=[
                pl.BlockSpec((1, L), lambda i, p: (0, 0)),      # hh (resident)
                pl.BlockSpec((1, L), lambda i, p: (0, 0)),      # ww (resident)
                pl.BlockSpec((tile, L), lambda i, p: (i, 0)),   # x tile
            ],
            out_specs=pl.BlockSpec((tile, L), lambda i, p: (i, 0)),
        ),
        compiler_params=pltpu.CompilerParams(
            dimension_semantics=("parallel",),
            vmem_limit_bytes=vmem_limit,
        ),
        cost_estimate=pl.CostEstimate(
            flops=N,
            transcendentals=0,
            bytes_accessed=2 * N * itemsize,
        ),
    )(params, hh, ww, x2)

    return out.reshape(B, C, H, W)


def batch_drop_forward(x, h_ratio, w_ratio, key, training=True):
    """Full BatchDrop.forward: draws (sx, sy) uniformly like random.randint."""
    if not training:
        return x
    H, W = x.shape[-2], x.shape[-1]
    rh = int(round(h_ratio * H))
    rw = int(round(w_ratio * W))
    ksx, ksy = jax.random.split(key)
    sx = jax.random.randint(ksx, (), 0, H - rh + 1, dtype=jnp.int32)
    sy = jax.random.randint(ksy, (), 0, W - rw + 1, dtype=jnp.int32)
    return batch_drop_apply(x, sx, sy, rh, rw)


def _reference(x, sx, sy, rh, rw):
    H, W = x.shape[-2], x.shape[-1]
    hh = jnp.arange(H)[:, None]
    ww = jnp.arange(W)[None, :]
    drop = (hh >= sx) & (hh < sx + rh) & (ww >= sy) & (ww < sy + rw)
    mask = jnp.where(drop, 0.0, 1.0).astype(x.dtype)
    return x * mask[None, None, :, :]


if __name__ == "__main__":
    # Primary shapes consistent with the module: x is [B, C, H, W].
    B, C, H, W = 2, 4, 16, 16
    h_ratio, w_ratio = 0.3, 0.5

    key = jax.random.PRNGKey(0)
    kx, ksx, ksy, kx2 = jax.random.split(key, 4)
    x = jax.random.normal(kx, (B, C, H, W), dtype=jnp.float32)

    rh = int(round(h_ratio * H))  # 5
    rw = int(round(w_ratio * W))  # 8
    sx = jax.random.randint(ksx, (), 0, H - rh + 1, dtype=jnp.int32)
    sy = jax.random.randint(ksy, (), 0, W - rw + 1, dtype=jnp.int32)

    out = batch_drop_apply(x, sx, sy, rh, rw)
    jax.block_until_ready(out)
    ref = _reference(x, sx, sy, rh, rw)
    assert out.shape == x.shape
    assert jnp.allclose(out, ref, atol=0.0, rtol=0.0), "BatchDrop kernel mismatch"

    # Secondary check: re-ID-style map where H*W (=192) is not a multiple of
    # 128, exercising the lcm-based lane-dense retiling path.
    x_b = jax.random.normal(kx2, (2, 3, 24, 8), dtype=jnp.float32)
    out_b = batch_drop_apply(x_b, 5, 2, 7, 4)
    jax.block_until_ready(out_b)
    ref_b = _reference(x_b, 5, 2, 7, 4)
    assert jnp.allclose(out_b, ref_b, atol=0.0, rtol=0.0), "BatchDrop kernel mismatch (24x8)"

    # Exercise the full random-rect forward and the eval-mode identity path.
    out_train = batch_drop_forward(x, h_ratio, w_ratio, jax.random.PRNGKey(1), training=True)
    out_eval = batch_drop_forward(x, h_ratio, w_ratio, jax.random.PRNGKey(2), training=False)
    jax.block_until_ready(out_train)
    assert jnp.array_equal(out_eval, x)

    print("KERNEL_OK")
</pallas_src>

<mosaic_0001>
module attributes {stable_mosaic.version = 11 : i64} {
  func.func @_batch_drop_kernel(%arg0: i32, %arg1: memref<4xi32, #tpu.memory_space<smem>>, %arg2: memref<1x256xi32, #tpu.memory_space<vmem>>, %arg3: memref<1x256xi32, #tpu.memory_space<vmem>>, %arg4: memref<8x256xf32, #tpu.memory_space<vmem>>, %arg5: memref<8x256xf32, #tpu.memory_space<vmem>>) attributes {dimension_semantics = [#tpu.dimension_semantics<parallel>], iteration_bounds = array<i64: 1>, scalar_prefetch = 1 : i64, scratch_operands = 0 : i64, tpu.core_type = #tpu.core_type<tc>, window_params = [{pipeline_mode = #tpu.pipeline_mode<synchronous>, transform_indices = @transform_0, window_bounds = array<i64: 1, 256>}, {pipeline_mode = #tpu.pipeline_mode<synchronous>, transform_indices = @transform_1, window_bounds = array<i64: 1, 256>}, {transform_indices = @transform_2, window_bounds = array<i64: 8, 256>}, {transform_indices = @transform_3, window_bounds = array<i64: 8, 256>}]} {
    %c0 = arith.constant 0 : index
    %0 = memref.load %arg1[%c0] : memref<4xi32, #tpu.memory_space<smem>>
    %c1 = arith.constant 1 : index
    %1 = memref.load %arg1[%c1] : memref<4xi32, #tpu.memory_space<smem>>
    %c2 = arith.constant 2 : index
    %2 = memref.load %arg1[%c2] : memref<4xi32, #tpu.memory_space<smem>>
    %c3 = arith.constant 3 : index
    %3 = memref.load %arg1[%c3] : memref<4xi32, #tpu.memory_space<smem>>
    %c0_0 = arith.constant 0 : index
    %c0_1 = arith.constant 0 : index
    %4 = vector.load %arg2[%c0_0, %c0_1] : memref<1x256xi32, #tpu.memory_space<vmem>>, vector<1x256xi32>
    %c0_2 = arith.constant 0 : index
    %c0_3 = arith.constant 0 : index
    %5 = vector.load %arg3[%c0_2, %c0_3] : memref<1x256xi32, #tpu.memory_space<vmem>>, vector<1x256xi32>
    %6 = vector.broadcast %0 : i32 to vector<1x256xi32>
    %7 = arith.cmpi sge, %4, %6 : vector<1x256xi32>
    %8 = arith.addi %0, %2 : i32
    %9 = vector.broadcast %8 : i32 to vector<1x256xi32>
    %10 = arith.cmpi slt, %4, %9 : vector<1x256xi32>
    %11 = arith.andi %7, %10 : vector<1x256xi1>
    %12 = vector.broadcast %1 : i32 to vector<1x256xi32>
    %13 = arith.cmpi sge, %5, %12 : vector<1x256xi32>
    %14 = arith.andi %11, %13 : vector<1x256xi1>
    %15 = arith.addi %1, %3 : i32
    %16 = vector.broadcast %15 : i32 to vector<1x256xi32>
    %17 = arith.cmpi slt, %5, %16 : vector<1x256xi32>
    %18 = arith.andi %14, %17 : vector<1x256xi1>
    %c0_4 = arith.constant 0 : index
    %c0_5 = arith.constant 0 : index
    %19 = vector.load %arg4[%c0_4, %c0_5] : memref<8x256xf32, #tpu.memory_space<vmem>>, vector<8x256xf32>
    %c0_i32 = arith.constant 0 : i32
    %20 = arith.sitofp %c0_i32 : i32 to f32
    %21 = vector.shape_cast %18 : vector<1x256xi1> to vector<1x256xi1>
    %22 = vector.broadcast %21 : vector<1x256xi1> to vector<8x256xi1>
    %23 = vector.broadcast %20 : f32 to vector<8x256xf32>
    %24 = arith.select %22, %23, %19 : vector<8x256xi1>, vector<8x256xf32>
    %c0_6 = arith.constant 0 : index
    %c0_7 = arith.constant 0 : index
    %25 = vector.load %arg5[%c0_6, %c0_7] : memref<8x256xf32, #tpu.memory_space<vmem>>, vector<8x256xf32>
    tpu.vector_store %arg5[%c0_6, %c0_7], %24 {strides = array<i32>} : memref<8x256xf32, #tpu.memory_space<vmem>>, vector<8x256xf32>,
    return
  }
  func.func @transform_0(%arg0: i32, %arg1: memref<4xi32, #tpu.memory_space<smem>>) -> (i32, i32) {
    %c0_i32 = arith.constant 0 : i32
    %c0_i32_0 = arith.constant 0 : i32
    %c0_i32_1 = arith.constant 0 : i32
    return %c0_i32, %c0_i32_0 : i32, i32
  }
  func.func @transform_1(%arg0: i32, %arg1: memref<4xi32, #tpu.memory_space<smem>>) -> (i32, i32) {
    %c0_i32 = arith.constant 0 : i32
    %c0_i32_0 = arith.constant 0 : i32
    %c0_i32_1 = arith.constant 0 : i32
    return %c0_i32, %c0_i32_0 : i32, i32
  }
  func.func @transform_2(%arg0: i32, %arg1: memref<4xi32, #tpu.memory_space<smem>>) -> (i32, i32) {
    %c0_i32 = arith.constant 0 : i32
    %c0_i32_0 = arith.constant 0 : i32
    return %arg0, %c0_i32 : i32, i32
  }
  func.func @transform_3(%arg0: i32, %arg1: memref<4xi32, #tpu.memory_space<smem>>) -> (i32, i32) {
    %c0_i32 = arith.constant 0 : i32
    %c0_i32_0 = arith.constant 0 : i32
    return %arg0, %c0_i32 : i32, i32
  }
}

</mosaic_0001>

<llo_original>
// kernel: tpu_custom_call.1
$region0: #{tpu_custom_call.1}
  #allocation0 [shape = 'u32[]', space=smem, size = 0x4, offset = 0x4, fixed_abs, tag = 'smem constant byte address 0x4 - core index']
  #allocation1 [shape = 'u32[72,128]{1,0:T(1,128)}', space=vmem, size = 0x9000, scoped, tag = 'internal scratch']
  #allocation2 [shape = 's32[1]{0}', space=sflag, size = 0x4, scoped, tag = 'scoped memory for tpu_custom_call.1']
  #allocation3 [shape = 'u8[512]{0}', space=smem, size = 0x200, scoped, tag = 'prefetched SMEM operand 0']
  %s0 = inlined_call_operand.hbm [shape: s32[4], index: 0, kind: input, shape index: {}]
  %s1 = inlined_call_operand.hbm [shape: s32[1,256], index: 1, kind: input, shape index: {}]
  %s2 = inlined_call_operand.hbm [shape: s32[1,256], index: 2, kind: input, shape index: {}]
  %s3 = inlined_call_operand.hbm [shape: f32[8,256], index: 3, kind: input, shape index: {}]
  %s4 = inlined_call_operand.hbm [shape: f32[8,256], index: 4, kind: output, shape index: {}]
  %s5 = sld [smem:[#allocation0]]
  $region34: #{tpu_custom_call.1} parent=0
    _
  %s7 = ssub.s32 1, %s5
  %s8 = scalar_select 0, %s7, %s5
  %s10 = sshll.u32 %s0, 4
  %s11 = int_to_ptr.hbm [resolvable:$true] %s10
  %13 = dma.hbm_to_smem %s11, 16, [#allocation3], [#allocation2]
  %15 = dma.done [#allocation2], 16
  %16 = sfence
  $region1: #{tpu_custom_call.1} parent=0
    #allocation4 [shape = 'u8[1024]{0}', space=vmem, size = 0x400, scoped, tag = 'input window, operand 1, single buffered']
    #allocation5 [shape = 's32[1]{0}', space=sflag, size = 0x4, scoped, tag = 'scoped memory for tpu_custom_call.1']
    #allocation6 [shape = 's32[1]{0}', space=sflag, size = 0x4, scoped, tag = 'scoped memory for tpu_custom_call.1']
    #allocation7 [shape = 'u8[1024]{0}', space=vmem, size = 0x400, scoped, tag = 'input window, operand 2, single buffered']
    #allocation8 [shape = 's32[1]{0}', space=sflag, size = 0x4, scoped, tag = 'scoped memory for tpu_custom_call.1']
    #allocation9 [shape = 'u8[8192]{0}', space=vmem, size = 0x2000, scoped, tag = 'input window, operand 3, single buffered']
    #allocation10 [shape = 'u8[8192]{0}', space=vmem, size = 0x2000, scoped, tag = 'output window, operand 0, single buffered']
    %17 = vsyncpa [#allocation5], 0
    %18 = vsyncpa [#allocation8], 0
    %19 = vsyncpa [#allocation6], 0
    // Predicated region
    $region2: #{tpu_custom_call.1} parent=1 // pred_check
      _
    $region3: #{tpu_custom_call.1} parent=1 // pred_check_branch
      %21 = sbr.rel (0) target = $region5
    $region4: #{tpu_custom_call.1} parent=1 // pred_region
      %23 = vsyncadd [#allocation5], 0
      %s25 = sshll.u32 %s1, 4
      %s26 = int_to_ptr.hbm [resolvable:$true] %s25
      %s27 = sshll.u32 [#allocation4], 4
      %s28 = int_to_ptr.vmem [resolvable:$true] %s27
      %30 = dma.hbm_to_vmem [thread:$0]  %s26, 32, %s28, [#allocation5]
    $region5: #{tpu_custom_call.1} parent=1 // pred_fallthru
      _
    // Predicated region
    $region6: #{tpu_custom_call.1} parent=1 // pred_check
      _
    $region7: #{tpu_custom_call.1} parent=1 // pred_check_branch
      %32 = sbr.rel (0) target = $region9
    $region8: #{tpu_custom_call.1} parent=1 // pred_region
      %34 = vsyncadd [#allocation8], 0
      %s36 = sshll.u32 %s2, 4
      %s37 = int_to_ptr.hbm [resolvable:$true] %s36
      %s38 = sshll.u32 [#allocation7], 4
      %s39 = int_to_ptr.vmem [resolvable:$true] %s38
      %41 = dma.hbm_to_vmem [thread:$0]  %s37, 32, %s39, [#allocation8]
    $region9: #{tpu_custom_call.1} parent=1 // pred_fallthru
      _
    // Predicated region
    $region10: #{tpu_custom_call.1} parent=1 // pred_check
      _
    $region11: #{tpu_custom_call.1} parent=1 // pred_check_branch
      %43 = sbr.rel (0) target = $region13
    $region12: #{tpu_custom_call.1} parent=1 // pred_region
      %45 = vsyncadd [#allocation8], 0
      %s47 = sshll.u32 %s3, 4
      %s48 = int_to_ptr.hbm [resolvable:$true] %s47
      %s49 = sshll.u32 [#allocation9], 4
      %s50 = int_to_ptr.vmem [resolvable:$true] %s49
      %52 = dma.hbm_to_vmem [thread:$0]  %s48, 256, %s50, [#allocation8]
    $region13: #{tpu_custom_call.1} parent=1 // pred_fallthru
      _
    // Predicated region
    $region14: #{tpu_custom_call.1} parent=1 // pred_check
      _
    $region15: #{tpu_custom_call.1} parent=1 // pred_check_branch
      %54 = sbr.rel (0) target = $region17
    $region16: #{tpu_custom_call.1} parent=1 // pred_region
      %56 = dma.done [#allocation5], 32
    $region17: #{tpu_custom_call.1} parent=1 // pred_fallthru
      _
    // Predicated region
    $region18: #{tpu_custom_call.1} parent=1 // pred_check
      _
    $region19: #{tpu_custom_call.1} parent=1 // pred_check_branch
      %58 = sbr.rel (0) target = $region21
    $region20: #{tpu_custom_call.1} parent=1 // pred_region
      %60 = dma.done [#allocation8], 32
    $region21: #{tpu_custom_call.1} parent=1 // pred_fallthru
      _
    // Predicated region
    $region22: #{tpu_custom_call.1} parent=1 // pred_check
      _
    $region23: #{tpu_custom_call.1} parent=1 // pred_check_branch
      %62 = sbr.rel (0) target = $region25
    $region24: #{tpu_custom_call.1} parent=1 // pred_region
      %64 = dma.done [#allocation8], 256
    $region25: #{tpu_custom_call.1} parent=1 // pred_fallthru
      _
    %s65 = sld [smem:[#allocation3]]
    %s66 = sld [smem:[#allocation3 + $0x1]]
    %s67 = sld [smem:[#allocation3 + $0x2]]
    %s68 = sld [smem:[#allocation3 + $0x3]]
    %v69 = vld [vmem:[#allocation4] sm:$0x3]
    %v70 = vld [vmem:[#allocation7] sm:$0x3]
    %v71 = vstv %s65
    %vm72 = vcmp.ge.s32.totalorder %v69, %v71
    %s73 = sadd.s32 %s65, %s67
    %v74 = vstv %s73
    %vm75 = vcmp.lt.s32.totalorder %v69, %v74
    %vm76 = vmand %vm72, %vm75
    %v77 = vstv %s66
    %vm78 = vcmp.ge.s32.totalorder %v70, %v77
    %vm79 = vmand %vm76, %vm78
    %s80 = sadd.s32 %s66, %s68
    %v81 = vstv %s80
    %vm82 = vcmp.lt.s32.totalorder %v70, %v81
    %vm83 = vmand %vm79, %vm82
    %v84 = vld [vmem:[#allocation9] sm:$0xff]
    %v85 = vld [vmem:[#allocation9 + $0x8] sm:$0xff]
    %v86 = vsel %vm83, 1, 0
    %v87 = vperm.slane %v86, 0
    %v88 = vperm.slane %v86, 1
    %vm89 = vcmp.eq.s32.totalorder %v87, 1
    %vm90 = vcmp.eq.s32.totalorder %v88, 1
    %v91 = vsel %vm89, 0.0, %v84
    %v92 = vsel %vm90, 0.0, %v85
    %93 = vst [vmem:[#allocation10] sm:$0xff] %v91
    %94 = vst [vmem:[#allocation10 + $0x8] sm:$0xff] %v92
    // Predicated region
    $region26: #{tpu_custom_call.1} parent=1 // pred_check
      _
    $region27: #{tpu_custom_call.1} parent=1 // pred_check_branch
      %96 = sbr.rel (0) target = $region29
    $region28: #{tpu_custom_call.1} parent=1 // pred_region
      %98 = vsyncadd [#allocation6], 0
      %s100 = sshll.u32 [#allocation10], 4
      %s101 = int_to_ptr.vmem [resolvable:$true] %s100
      %s102 = sshll.u32 %s4, 4
      %s103 = int_to_ptr.hbm [resolvable:$true] %s102
      %105 = dma.vmem_to_hbm [thread:$0]  %s101, 256, %s103, [#allocation6]
    $region29: #{tpu_custom_call.1} parent=1 // pred_fallthru
      _
    // Predicated region
    $region30: #{tpu_custom_call.1} parent=1 // pred_check
      _
    $region31: #{tpu_custom_call.1} parent=1 // pred_check_branch
      %107 = sbr.rel (0) target = $region33
    $region32: #{tpu_custom_call.1} parent=1 // pred_region
      %109 = dma.done [#allocation6], 256
    $region33: #{tpu_custom_call.1} parent=1 // pred_fallthru
      _
    %110 = vsyncpa [#allocation5], 1
    %111 = vsyncpa [#allocation8], 1
    %112 = vsyncpa [#allocation6], 1

</llo_original>
